<compile_context>
chip_gen: v7x
topology: tpu7x:2x2x1
jax: 0.10.0
libtpu: 0.0.40
codegen_flags: <defaults>
</compile_context>

<pallas_src>
import numpy as np
import jax
import jax.numpy as jnp
from jax.experimental import pallas as pl
from jax.experimental.pallas import tpu as pltpu

# ---- small synthetic config (module assumes input channels == conv_dim and
#      db_features spatial == 2 * mask_features spatial) -----------------------
N = 2            # number of ROIs
C = 8            # conv_dim == input channels
HM = WM = 8      # mask_features spatial size
HD = WD = 16     # db_features spatial size (2x mask)
K = 1            # num_classes (CLS_AGNOSTIC_MASK -> 1)
NUM_CONV = 4     # cfg.MODEL.ROI_MASK_HEAD.NUM_CONV
NUM_DB_CONV = 2  # cfg.MODEL.DB_MASK_HEAD.NUM_CONV
STEP_K = 50.0    # self.k in step_function

SPATIAL = N * HM * WM     # 128 -> lane dimension of every in-kernel tensor
NUM_TAPS = 9              # taps of a 3x3 conv
NUM_CONV3 = NUM_CONV + NUM_DB_CONV + 2   # mask_fcns + downsample + db_fcns + fusion


def _round8(r):
    return (r + 7) // 8 * 8


def _build_layout():
    """Row layout of the single packed parameter buffer.  Every block is padded
    to a multiple of 8 sublanes and to 128 lanes so all in-kernel loads are
    tile-aligned static slices."""
    blocks = []
    for i in range(NUM_CONV3):
        blocks.append((f"w3_{i}", C, NUM_TAPS * C))      # fused (Co, 9*Ci) 3x3 weight
        blocks.append((f"b3_{i}", C, SPATIAL))           # pre-broadcast bias
    blocks += [
        ("w_m2d", C, C), ("b_m2d", C, SPATIAL),
        ("w_d2m", C, C), ("b_d2m", C, SPATIAL),
        ("wdec_m", 4 * C, C), ("bdec_m", 4 * C, SPATIAL),
        ("wpred_m", 4, 4 * C), ("bpred_m", 4, SPATIAL),
        ("wdec_d", 4 * C, C), ("bdec_d", 4 * C, SPATIAL),
        ("wpred_d", 4, 4 * C), ("bpred_d", 4, SPATIAL),
        ("tapmask", NUM_TAPS * C, SPATIAL),              # 0/1 boundary masks per tap
    ]
    layout = {}
    off = 0
    for name, r, c in blocks:
        layout[name] = (off, r, c)
        off += _round8(r)
    return tuple(blocks), layout, off


_BLOCKS, _LAYOUT, _TOTAL_ROWS = _build_layout()


# ------------------------- pltpu.roll direction probe --------------------------
_ROLL_LIKE_JNP = None


def _roll_matches_jnp():
    """Probe the hardware rotate direction once so the static lane shifts used to
    gather the 3x3-conv neighbour taps are always correct."""
    global _ROLL_LIKE_JNP
    if _ROLL_LIKE_JNP is None:
        def probe(x_ref, o_ref):
            o_ref[...] = pltpu.roll(x_ref[...], shift=1, axis=1)

        x = jnp.broadcast_to(
            jnp.arange(SPATIAL, dtype=jnp.float32)[None, :], (8, SPATIAL))
        y = pl.pallas_call(
            probe,
            out_shape=jax.ShapeDtypeStruct((8, SPATIAL), jnp.float32),
            in_specs=[pl.BlockSpec(memory_space=pltpu.MemorySpace.VMEM)],
            out_specs=pl.BlockSpec(memory_space=pltpu.MemorySpace.VMEM),
        )(x)
        _ROLL_LIKE_JNP = float(np.asarray(y)[0, 0]) == float(SPATIAL - 1)
    return _ROLL_LIKE_JNP


def _gather_shifts():
    """Static lane shift per tap t=(dy,dx) so rolled[:, p] == x[:, p + s_t]."""
    like_jnp = _roll_matches_jnp()
    shifts = []
    for t in range(NUM_TAPS):
        dy, dx = divmod(t, 3)
        s = (dy - 1) * WM + (dx - 1)
        shifts.append(((-s) % SPATIAL) if like_jnp else (s % SPATIAL))
    return tuple(shifts)


# ---------------------------------- kernel ------------------------------------
def _sigmoid(x):
    return 1.0 / (1.0 + jnp.exp(-x))


def _make_kernel(gather_shifts):
    def kernel(mask_ref, db_patch_ref, params_ref, out_ref):
        def get(name):
            off, r, c = _LAYOUT[name]
            if c == SPATIAL:
                return params_ref[off:off + r, :]
            return params_ref[off:off + r, 0:c]

        tap_mask = get("tapmask")                            # (9C, S) 0/1 masks

        def im2col(x):
            # lane-rolled copies of the (C, S) activation, boundary-masked,
            # stacked along sublanes -> (9C, S) patch for one MXU contraction.
            taps = []
            for t in range(NUM_TAPS):
                sh = gather_shifts[t]
                taps.append(x if sh == 0 else pltpu.roll(x, shift=sh, axis=1))
            return jnp.concatenate(taps, axis=0) * tap_mask

        def conv3x3_relu(x, w, b):
            y = jnp.dot(w, im2col(x), preferred_element_type=jnp.float32) + b
            return jnp.maximum(y, 0.0)

        def conv1x1_relu(x, w, b):
            y = jnp.dot(w, x, preferred_element_type=jnp.float32) + b
            return jnp.maximum(y, 0.0)

        # --- mask branch: stack of 3x3 convs + relu
        mask = mask_ref[...]                                 # (C, S)
        for i in range(NUM_CONV):
            mask = conv3x3_relu(mask, get(f"w3_{i}"), get(f"b3_{i}"))

        # --- db branch: stride-2 downsample (im2col patch precomputed in the
        #     wrapper), cross fusion, 3x3 convs.
        db = jnp.maximum(
            jnp.dot(get(f"w3_{NUM_CONV}"), db_patch_ref[...],
                    preferred_element_type=jnp.float32) + get(f"b3_{NUM_CONV}"),
            0.0)
        db = db + conv1x1_relu(mask, get("w_m2d"), get("b_m2d"))   # += mask_to_db
        for i in range(NUM_DB_CONV):
            j = NUM_CONV + 1 + i
            db = conv3x3_relu(db, get(f"w3_{j}"), get(f"b3_{j}"))

        # --- fuse back into mask branch
        mask = conv1x1_relu(db, get("w_d2m"), get("b_d2m")) + mask  # db_to_mask + mask
        j = NUM_CONV + NUM_DB_CONV + 1
        mask = conv3x3_relu(mask, get(f"w3_{j}"), get(f"b3_{j}"))   # final fusion

        # --- 2x2/stride-2 deconvs: all 4 (ky,kx) interleave branches stacked on
        #     sublanes (one matmul each), block-diagonal 1x1 predictors, sigmoid,
        #     step function.  Everything stays (rows, 128) lane-dense.
        m_up = jnp.maximum(
            jnp.dot(get("wdec_m"), mask, preferred_element_type=jnp.float32)
            + get("bdec_m"), 0.0)                                   # (4C, S)
        p = _sigmoid(jnp.dot(get("wpred_m"), m_up,
                             preferred_element_type=jnp.float32) + get("bpred_m"))
        d_up = jnp.maximum(
            jnp.dot(get("wdec_d"), db, preferred_element_type=jnp.float32)
            + get("bdec_d"), 0.0)
        t = _sigmoid(jnp.dot(get("wpred_d"), d_up,
                             preferred_element_type=jnp.float32) + get("bpred_d"))
        tb = _sigmoid(STEP_K * (p - t))                             # step function
        pad = jnp.zeros((4, SPATIAL), jnp.float32)                  # tile-align store
        out_ref[...] = jnp.concatenate([p, t, tb, pad], axis=0)     # (16, S)

    return kernel


# ------------------------------ parameter packing ------------------------------
def _pack_params(params):
    """Repack the 14 (w, b) layers into one (R, 128) f32 buffer in the transposed
    / fused layout the kernel consumes (single DMA)."""
    def t3x3(w):                   # (3,3,Ci,Co) -> (Co, 9*Ci), tap-major rows
        return jnp.reshape(w, (NUM_TAPS * C, C)).T

    def bcast(b, rows):            # bias -> pre-broadcast (rows, SPATIAL)
        return jnp.broadcast_to(jnp.reshape(b, (rows, 1)), (rows, SPATIAL))

    def tdec(w):                   # (2,2,Ci,Co) -> (4*Co, Ci), branch = 2*ky+kx
        return jnp.concatenate(
            [w[ky, kx].T for ky in range(2) for kx in range(2)], axis=0)

    def pred_blockdiag(w):         # (Ci, K=1) -> (4, 4*Ci) block-diagonal
        return jnp.kron(jnp.eye(4, dtype=jnp.float32), w.T)

    i_down = NUM_CONV
    i_m2d = NUM_CONV + 1
    i_dbf = [NUM_CONV + 2 + i for i in range(NUM_DB_CONV)]
    i_d2m = NUM_CONV + 2 + NUM_DB_CONV
    i_fuse = NUM_CONV + 3 + NUM_DB_CONV
    i_mdec, i_mpred, i_ddec, i_dpred = i_fuse + 1, i_fuse + 2, i_fuse + 3, i_fuse + 4

    conv3_src = list(range(NUM_CONV)) + [i_down] + i_dbf + [i_fuse]

    edict = {}
    for j, pi in enumerate(conv3_src):
        w, b = params[pi]
        edict[f"w3_{j}"] = t3x3(w)
        edict[f"b3_{j}"] = bcast(b, C)
    w, b = params[i_m2d]
    edict["w_m2d"], edict["b_m2d"] = w.T, bcast(b, C)
    w, b = params[i_d2m]
    edict["w_d2m"], edict["b_d2m"] = w.T, bcast(b, C)
    w, b = params[i_mdec]
    edict["wdec_m"], edict["bdec_m"] = tdec(w), bcast(jnp.tile(b, 4), 4 * C)
    w, b = params[i_mpred]
    edict["wpred_m"] = pred_blockdiag(w)
    edict["bpred_m"] = bcast(jnp.broadcast_to(b, (4,)), 4)
    w, b = params[i_ddec]
    edict["wdec_d"], edict["bdec_d"] = tdec(w), bcast(jnp.tile(b, 4), 4 * C)
    w, b = params[i_dpred]
    edict["wpred_d"] = pred_blockdiag(w)
    edict["bpred_d"] = bcast(jnp.broadcast_to(b, (4,)), 4)

    # 0/1 boundary-validity masks for the 9 taps of a 3x3 / pad-1 conv at the
    # 8x8 mask resolution, pre-broadcast over the C sublanes of each tap block.
    tap_mask = np.zeros((NUM_TAPS * C, SPATIAL), np.float32)
    for t in range(NUM_TAPS):
        dy, dx = divmod(t, 3)
        m = np.zeros((N, HM, WM), np.float32)
        m[:, max(0, 1 - dy):min(HM, HM + 1 - dy),
          max(0, 1 - dx):min(WM, WM + 1 - dx)] = 1.0
        tap_mask[t * C:(t + 1) * C, :] = m.reshape(1, SPATIAL)
    edict["tapmask"] = jnp.asarray(tap_mask)

    padded = []
    for name, r, c in _BLOCKS:
        arr = jnp.asarray(edict[name], jnp.float32)
        padded.append(jnp.pad(arr, ((0, _round8(r) - r), (0, SPATIAL - c))))
    return jnp.concatenate(padded, axis=0)


# --------------------------------- wrapper -------------------------------------
def db_preserving_head_forward(mask_features_nchw, db_features_nchw, params):
    """Inputs are NCHW (PyTorch convention); returns NCHW
    (probability_logits, threshold_logits, thresh_binary), each (N, K, 2*HM, 2*WM)."""
    gather_shifts = _gather_shifts()

    # channels -> sublanes, flattened (n, h, w) -> lanes.
    mask_t = jnp.transpose(mask_features_nchw.astype(jnp.float32),
                           (1, 0, 2, 3)).reshape(C, SPATIAL)

    # stride-2 3x3 downsample im2col: its input never changes inside the kernel,
    # so the strided gather is pure layout plumbing done here once.
    db_x = jnp.transpose(db_features_nchw.astype(jnp.float32), (0, 2, 3, 1))
    db_pad = jnp.pad(db_x, ((0, 0), (1, 1), (1, 1), (0, 0)))
    taps = []
    for dy in range(3):
        for dx in range(3):
            tap = db_pad[:, dy:dy + HD:2, dx:dx + WD:2, :]           # (N, 8, 8, C)
            taps.append(jnp.transpose(tap, (3, 0, 1, 2)).reshape(C, SPATIAL))
    db_patches = jnp.concatenate(taps, axis=0)                       # (9*C, S)

    packed = _pack_params(params)

    # TODO(synk): for large ROI counts add a ("parallel",) grid over ROI chunks so
    # v7x's two TensorCores split the work; at N=2 everything fits one grid step.
    out = pl.pallas_call(
        _make_kernel(gather_shifts),
        out_shape=jax.ShapeDtypeStruct((16, SPATIAL), jnp.float32),
        in_specs=[pl.BlockSpec(memory_space=pltpu.MemorySpace.VMEM)
                  for _ in range(3)],
        out_specs=pl.BlockSpec(memory_space=pltpu.MemorySpace.VMEM),
    )(mask_t, db_patches, packed)

    def assemble(rows4):
        # (4, S) with row = 2*ky + kx, lane = n*HM*WM + h*WM + w
        #   -> NCHW (N, K=1, 2*HM, 2*WM)
        y = rows4.reshape(2, 2, N, HM, WM)
        y = jnp.transpose(y, (2, 3, 0, 4, 1))                # (n, h, ky, w, kx)
        return y.reshape(N, 2 * HM, 2 * WM)[:, None]

    return assemble(out[0:4]), assemble(out[4:8]), assemble(out[8:12])


# ------------------------ deterministic parameter init -------------------------
def init_params(key):
    keys = iter(jax.random.split(key, 64))

    def conv3x3(ci, co):
        w = jax.random.normal(next(keys), (3, 3, ci, co), jnp.float32) * (2.0 / (9 * ci)) ** 0.5
        return (w, jnp.zeros((co,), jnp.float32))

    def conv1x1(ci, co, std=None):
        scale = std if std is not None else (2.0 / ci) ** 0.5
        w = jax.random.normal(next(keys), (ci, co), jnp.float32) * scale
        return (w, jnp.zeros((co,), jnp.float32))

    def deconv2x2(ci, co):
        w = jax.random.normal(next(keys), (2, 2, ci, co), jnp.float32) * (2.0 / (4 * ci)) ** 0.5
        return (w, jnp.zeros((co,), jnp.float32))

    params = []
    for _ in range(NUM_CONV):
        params.append(conv3x3(C, C))          # mask_fcn{k}
    params.append(conv3x3(C, C))              # downsample
    params.append(conv1x1(C, C))              # mask_to_db
    for _ in range(NUM_DB_CONV):
        params.append(conv3x3(C, C))          # db_fcn{k}
    params.append(conv1x1(C, C))              # db_to_mask
    params.append(conv3x3(C, C))              # mask_final_fusion
    params.append(deconv2x2(C, C))            # mask_deconv
    params.append(conv1x1(C, K, std=0.001))   # mask_predictor (std=0.001, bias=0)
    params.append(deconv2x2(C, C))            # db_deconv
    params.append(conv1x1(C, K, std=0.001))   # db_predictor
    return params


# ------------------------------ pure-JAX reference ------------------------------
def reference_forward(mask_features_nchw, db_features_nchw, params):
    HI = jax.lax.Precision.HIGHEST
    mask = jnp.transpose(mask_features_nchw, (0, 2, 3, 1)).astype(jnp.float32)
    db = jnp.transpose(db_features_nchw, (0, 2, 3, 1)).astype(jnp.float32)

    def conv(x, w, b, stride=1, relu=True):
        y = jax.lax.conv_general_dilated(
            x, w, (stride, stride), [(1, 1), (1, 1)],
            dimension_numbers=('NHWC', 'HWIO', 'NHWC'), precision=HI) + b
        return jnp.maximum(y, 0.0) if relu else y

    def conv1(x, w, b, relu=True):
        y = jnp.einsum('nhwc,cd->nhwd', x, w, precision=HI) + b
        return jnp.maximum(y, 0.0) if relu else y

    def deconv(x, w, b):
        t = jnp.einsum('nhwc,yxcd->nhywxd', x, w, precision=HI)
        n, h, _, wd, _, d = t.shape
        return t.reshape(n, 2 * h, 2 * wd, d) + b

    it = iter(params)
    mask_fcns = [next(it) for _ in range(NUM_CONV)]
    down = next(it); m2d = next(it)
    db_fcns = [next(it) for _ in range(NUM_DB_CONV)]
    d2m = next(it); fuse = next(it)
    mdec = next(it); mpred = next(it)
    ddec = next(it); dpred = next(it)

    for w, b in mask_fcns:
        mask = conv(mask, w, b)
    dbf = conv(db, *down, stride=2)
    dbf = dbf + conv1(mask, *m2d)
    for w, b in db_fcns:
        dbf = conv(dbf, w, b)
    mask = conv1(dbf, *d2m) + mask
    mask = conv(mask, *fuse)

    m_up = jnp.maximum(deconv(mask, *mdec), 0.0)
    p = jax.nn.sigmoid(conv1(m_up, *mpred, relu=False))
    d_up = jnp.maximum(deconv(dbf, *ddec), 0.0)
    t = jax.nn.sigmoid(conv1(d_up, *dpred, relu=False))
    tb = 1.0 / (1.0 + jnp.exp(-STEP_K * (p - t)))

    to_nchw = lambda x: jnp.transpose(x, (0, 3, 1, 2))
    return to_nchw(p), to_nchw(t), to_nchw(tb)


if __name__ == "__main__":
    key = jax.random.PRNGKey(0)
    k1, k2, k3 = jax.random.split(key, 3)
    mask_features = jax.random.normal(k1, (N, C, HM, WM), jnp.float32)
    db_features = jax.random.normal(k2, (N, C, HD, WD), jnp.float32)
    params = init_params(k3)

    p, t, b = db_preserving_head_forward(mask_features, db_features, params)
    jax.block_until_ready((p, t, b))

    p_ref, t_ref, b_ref = reference_forward(mask_features, db_features, params)
    for got, ref in ((p, p_ref), (t, t_ref), (b, b_ref)):
        np.testing.assert_allclose(np.asarray(got), np.asarray(ref),
                                   rtol=2e-3, atol=2e-3)

    print("KERNEL_OK")
</pallas_src>

<mosaic_0001>
module attributes {stable_mosaic.version = 11 : i64} {
  func.func @probe(%arg0: memref<8x128xf32, #tpu.memory_space<vmem>>, %arg1: memref<8x128xf32, #tpu.memory_space<vmem>>) attributes {dimension_semantics = [], scalar_prefetch = 0 : i64, scratch_operands = 0 : i64, tpu.core_type = #tpu.core_type<tc>} {
    %c0 = arith.constant 0 : index
    %c0_0 = arith.constant 0 : index
    %0 = vector.load %arg0[%c0, %c0_0] : memref<8x128xf32, #tpu.memory_space<vmem>>, vector<8x128xf32>
    %c1_i32 = arith.constant 1 : i32
    %1 = tpu.dynamic_rotate %0 by %c1_i32 dim 1 : vector<8x128xf32>, i32 -> vector<8x128xf32>
    %c0_1 = arith.constant 0 : index
    %c0_2 = arith.constant 0 : index
    %2 = vector.load %arg1[%c0_1, %c0_2] : memref<8x128xf32, #tpu.memory_space<vmem>>, vector<8x128xf32>
    tpu.vector_store %arg1[%c0_1, %c0_2], %1 {strides = array<i32>} : memref<8x128xf32, #tpu.memory_space<vmem>>, vector<8x128xf32>,
    return
  }
}

</mosaic_0001>

<llo_original>
// kernel: tpu_custom_call.1
$region0: #{tpu_custom_call.1}
  #allocation0 [shape = 'u32[]', space=smem, size = 0x4, offset = 0x4, fixed_abs, tag = 'smem constant byte address 0x4 - core index']
  #allocation1 [shape = 'u32[144,128]{1,0:T(1,128)}', space=vmem, size = 0x12000, scoped, tag = 'internal scratch']
  %s0 = inlined_call_operand.hbm [shape: f32[8,128], index: 0, kind: input, shape index: {}]
  %s1 = inlined_call_operand.hbm [shape: f32[8,128], index: 1, kind: output, shape index: {}]
  %s2 = sld [smem:[#allocation0]]
  $region18: #{tpu_custom_call.1} parent=0
    _
  %s4 = ssub.s32 1, %s2
  %s5 = scalar_select 0, %s4, %s2
  $region1: #{tpu_custom_call.1} parent=0
    #allocation2 [shape = 'u8[4096]{0}', space=vmem, size = 0x1000, scoped, tag = 'input window, operand 0, single buffered']
    #allocation3 [shape = 's32[1]{0}', space=sflag, size = 0x4, scoped, tag = 'scoped memory for tpu_custom_call.1']
    #allocation4 [shape = 's32[1]{0}', space=sflag, size = 0x4, scoped, tag = 'scoped memory for tpu_custom_call.1']
    #allocation5 [shape = 'u8[4096]{0}', space=vmem, size = 0x1000, scoped, tag = 'output window, operand 0, single buffered']
    %6 = vsyncpa [#allocation3], 0
    %7 = vsyncpa [#allocation4], 0
    // Predicated region
    $region2: #{tpu_custom_call.1} parent=1 // pred_check
      _
    $region3: #{tpu_custom_call.1} parent=1 // pred_check_branch
      %9 = sbr.rel (0) target = $region5
    $region4: #{tpu_custom_call.1} parent=1 // pred_region
      %s11 = ssub.s32 128, 128
      %12 = vsyncadd [#allocation3], %s11
      %s14 = sshll.u32 [#allocation2], 4
      %s15 = int_to_ptr.vmem [resolvable:$true] %s14
      %17 = dma.hbm_to_vmem [thread:$0]  %s0, 128, %s15, [#allocation3]
    $region5: #{tpu_custom_call.1} parent=1 // pred_fallthru
      _
    // Predicated region
    $region6: #{tpu_custom_call.1} parent=1 // pred_check
      _
    $region7: #{tpu_custom_call.1} parent=1 // pred_check_branch
      %19 = sbr.rel (0) target = $region9
    $region8: #{tpu_custom_call.1} parent=1 // pred_region
      %20 = dma.done [#allocation3], 128
    $region9: #{tpu_custom_call.1} parent=1 // pred_fallthru
      _
    %v21 = vld [vmem:[#allocation2] sm:$0xff]
    %22 = vrot.lane.b32.xlu0 %v21, 1
    %v23 = vpop.permute.xlu0 %22
    %24 = vst [vmem:[#allocation5] sm:$0xff] %v23
    // Predicated region
    $region10: #{tpu_custom_call.1} parent=1 // pred_check
      _
    $region11: #{tpu_custom_call.1} parent=1 // pred_check_branch
      %26 = sbr.rel (0) target = $region13
    $region12: #{tpu_custom_call.1} parent=1 // pred_region
      %s28 = ssub.s32 128, 128
      %29 = vsyncadd [#allocation4], %s28
      %s31 = sshll.u32 [#allocation5], 4
      %s32 = int_to_ptr.vmem [resolvable:$true] %s31
      %34 = dma.vmem_to_hbm [thread:$0]  %s32, 128, %s1, [#allocation4]
    $region13: #{tpu_custom_call.1} parent=1 // pred_fallthru
      _
    // Predicated region
    $region14: #{tpu_custom_call.1} parent=1 // pred_check
      _
    $region15: #{tpu_custom_call.1} parent=1 // pred_check_branch
      %36 = sbr.rel (0) target = $region17
    $region16: #{tpu_custom_call.1} parent=1 // pred_region
      %37 = dma.done [#allocation4], 128
    $region17: #{tpu_custom_call.1} parent=1 // pred_fallthru
      _
    %38 = vsyncpa [#allocation3], 1
    %39 = vsyncpa [#allocation4], 1

</llo_original>
